<compile_context>
chip_gen: v5e
topology: v5e:2x2
jax: 0.10.0
libtpu: 0.0.40
codegen_flags: <defaults>
</compile_context>

<pallas_src>
import functools

import jax
import jax.numpy as jnp
from jax.experimental import pallas as pl
from jax.experimental.pallas import tpu as pltpu


_LANE = 128          # lane width (last-dim tile)
_SUBLANE_F32 = 8     # sublane pack for f32 (state enters the kernel as f32)


def _round_up(x: int, m: int) -> int:
    return (x + m - 1) // m * m


def make_actor_kernel(max_action: float):
    """Returns a kernel closure with max_action baked in as a constant."""

    def actor_kernel(s_ref, w1_ref, b1_ref, w2_ref, b2_ref, w3_ref, b3_ref,
                     o_ref):
        # Cast the f32 state tile to bf16 on-chip (no external XLA pass).
        s = s_ref[...].astype(jnp.bfloat16)
        # Layer 1: bf16 GEMM on the MXU, f32 accumulate, f32 bias + ReLU.
        a = jnp.dot(s, w1_ref[...], preferred_element_type=jnp.float32)
        a = jnp.maximum(a + b1_ref[...], 0.0)
        # Layer 2: cast activations to bf16 only for the MXU input.
        a = jnp.dot(a.astype(jnp.bfloat16), w2_ref[...],
                    preferred_element_type=jnp.float32)
        a = jnp.maximum(a + b2_ref[...], 0.0)
        # Layer 3 + f32 tanh epilogue (EUP), scaled by max_action.
        a = jnp.dot(a.astype(jnp.bfloat16), w3_ref[...],
                    preferred_element_type=jnp.float32)
        o_ref[...] = (max_action * jnp.tanh(a + b3_ref[...])).astype(o_ref.dtype)

    return actor_kernel


def prepare_actor_params(params):
    """One-time weight prep: lane-pad H/A to 128 multiples, cast to bf16.

    Call this once (and again whenever the f32 params are updated); the
    returned dict is what actor_forward consumes every step, so no cast/pad
    XLA ops run per forward call.  Zero padding is numerically exact:
    relu(0 + 0) = 0 and tanh(0) = 0, and the extra lanes are sliced off.
    """
    S, H = params["w1"].shape
    A = params["w3"].shape[1]
    H_pad = _round_up(H, _LANE)
    A_pad = _round_up(A, _LANE)

    def pad2(x, rows, cols):
        return jnp.pad(x, ((0, rows - x.shape[0]), (0, cols - x.shape[1])))

    return {
        "w1": pad2(params["w1"], S, H_pad).astype(jnp.bfloat16),
        "b1": pad2(params["b1"], 1, H_pad).astype(jnp.float32),
        "w2": pad2(params["w2"], H_pad, H_pad).astype(jnp.bfloat16),
        "b2": pad2(params["b2"], 1, H_pad).astype(jnp.float32),
        "w3": pad2(params["w3"], H_pad, A_pad).astype(jnp.bfloat16),
        "b3": pad2(params["b3"], 1, A_pad).astype(jnp.float32),
    }


def _choose_batch_tile(B: int, block_b: int) -> int:
    """Pick the batch tile TB (rows per grid step)."""
    if B <= 2 * _SUBLANE_F32:
        # Tiny batch: one full-extent block, no padding, grid = (1,).
        return B
    # Aim for >= 2 grid steps so the "parallel" grid axis can shard across
    # v7x's two TensorCores (harmless on single-TC v5e/v6e); large batches
    # are capped at block_b (256 default -> MXU-friendly 256-row tiles).
    tb = _round_up(-(-B // 2), _SUBLANE_F32)
    return min(tb, block_b)


@functools.partial(
    jax.jit,
    static_argnames=("action_dim", "max_action", "block_b", "out_dtype"))
def actor_forward(state, prepped, *, action_dim: int, max_action: float,
                  block_b: int = 256, out_dtype=jnp.float32):
    """Fused Pallas forward pass of the Actor MLP.

    state:   [B, state_dim] float32
    prepped: output of prepare_actor_params (bf16 lane-padded weights,
             f32 lane-padded biases, stored [in, out]).
    returns  [B, action_dim] out_dtype (default float32, matching PyTorch)
    """
    B, S = state.shape
    S_w, H_pad = prepped["w1"].shape
    A_pad = prepped["w3"].shape[1]
    assert S == S_w, "state dim mismatch with prepared params"

    TB = _choose_batch_tile(B, block_b)
    B_pad = _round_up(B, TB)
    n_blocks = B_pad // TB

    # Pad the batch only when the last tile would be ragged; no dtype cast
    # here -- the bf16 cast happens on the VMEM tile inside the kernel.
    s_in = state if B_pad == B else jnp.pad(state, ((0, B_pad - B), (0, 0)))

    def resident(shape):
        # Same block every grid step => stays VMEM-resident across the whole
        # grid; single buffer (double-buffering a constant block is waste).
        return pl.BlockSpec(shape, lambda i: (0, 0),
                            pipeline_mode=pl.Buffered(1))

    grid_spec = pltpu.PrefetchScalarGridSpec(
        num_scalar_prefetch=0,
        grid=(n_blocks,),
        in_specs=[
            pl.BlockSpec((TB, S), lambda i: (i, 0)),   # state tile (pipelined)
            resident((S, H_pad)),                      # w1
            resident((1, H_pad)),                      # b1
            resident((H_pad, H_pad)),                  # w2
            resident((1, H_pad)),                      # b2
            resident((H_pad, A_pad)),                  # w3 (lane-padded)
            resident((1, A_pad)),                      # b3 (lane-padded)
        ],
        out_specs=pl.BlockSpec((TB, A_pad), lambda i: (i, 0)),
    )

    out_itemsize = jnp.dtype(out_dtype).itemsize
    weight_bytes = sum(
        int(prepped[k].size) * prepped[k].dtype.itemsize
        for k in ("w1", "w2", "w3", "b1", "b2", "b3"))
    io_bytes = 2 * TB * S * 4 + 2 * TB * A_pad * out_itemsize  # 2x-buffered tiles
    act_bytes = 3 * TB * H_pad * 4                             # f32/bf16 temporaries
    vmem_limit = int(1.5 * (weight_bytes + io_bytes + act_bytes)) + (2 << 20)
    vmem_limit = max(8 << 20, min(vmem_limit, 128 << 20))

    flops = 2 * B_pad * (S * H_pad + H_pad * H_pad + H_pad * A_pad)
    bytes_accessed = (B_pad * S * 4 + weight_bytes
                      + B_pad * A_pad * out_itemsize)
    cost = pl.CostEstimate(flops=flops, transcendentals=B_pad * A_pad,
                           bytes_accessed=bytes_accessed)

    out_padded = pl.pallas_call(
        make_actor_kernel(max_action),
        out_shape=jax.ShapeDtypeStruct((B_pad, A_pad), out_dtype),
        grid_spec=grid_spec,
        compiler_params=pltpu.CompilerParams(
            dimension_semantics=("parallel",),
            vmem_limit_bytes=vmem_limit,
        ),
        cost_estimate=cost,
    )(s_in, prepped["w1"], prepped["b1"], prepped["w2"], prepped["b2"],
      prepped["w3"], prepped["b3"])

    return out_padded[:B, :action_dim]


def init_actor_params(key, state_dim, action_dim, hidden_dim):
    """Deterministic init matching nn.Linear's U(-1/sqrt(fan_in), 1/sqrt(fan_in))."""
    ks = jax.random.split(key, 6)

    def lin(kw, kb, fan_in, fan_out):
        bound = 1.0 / jnp.sqrt(jnp.float32(fan_in))
        # stored transposed: [in, out]
        w = jax.random.uniform(kw, (fan_in, fan_out), jnp.float32, -bound, bound)
        b = jax.random.uniform(kb, (1, fan_out), jnp.float32, -bound, bound)
        return w, b

    w1, b1 = lin(ks[0], ks[1], state_dim, hidden_dim)
    w2, b2 = lin(ks[2], ks[3], hidden_dim, hidden_dim)
    w3, b3 = lin(ks[4], ks[5], hidden_dim, action_dim)
    return {"w1": w1, "b1": b1, "w2": w2, "b2": b2, "w3": w3, "b3": b3}


def actor_forward_ref_f32(state, params, max_action):
    """Pure-JAX f32 reference for semantic correctness."""
    a = jnp.maximum(state @ params["w1"] + params["b1"], 0.0)
    a = jnp.maximum(a @ params["w2"] + params["b2"], 0.0)
    return max_action * jnp.tanh(a @ params["w3"] + params["b3"])


def actor_forward_ref_bf16(state, params, max_action):
    """Pure-JAX reference mirroring the kernel's bf16-in / f32-accumulate numerics."""
    def mm(x, w):
        return jnp.dot(x.astype(jnp.bfloat16), w.astype(jnp.bfloat16),
                       preferred_element_type=jnp.float32)
    a = jnp.maximum(mm(state, params["w1"]) + params["b1"], 0.0)
    a = jnp.maximum(mm(a, params["w2"]) + params["b2"], 0.0)
    return max_action * jnp.tanh(mm(a, params["w3"]) + params["b3"])


if __name__ == "__main__":
    key = jax.random.PRNGKey(0)
    k_param, k_state, k_state2 = jax.random.split(key, 3)

    # Small shapes consistent with the module's forward.
    batch = 2
    state_dim = 16
    hidden_dim = 32
    action_dim = 8
    max_action = 2.0

    params = init_actor_params(k_param, state_dim, action_dim, hidden_dim)
    prepped = prepare_actor_params(params)   # one-time pad + bf16 cast

    state = jax.random.normal(k_state, (batch, state_dim), jnp.float32)
    out = actor_forward(state, prepped, action_dim=action_dim,
                        max_action=max_action)
    out = jax.block_until_ready(out)

    ref_bf16 = actor_forward_ref_bf16(state, params, max_action)
    ref_f32 = actor_forward_ref_f32(state, params, max_action)

    assert out.shape == (batch, action_dim)
    assert out.dtype == jnp.float32
    # Tight check against the matched bf16-numerics reference.
    assert jnp.allclose(out, ref_bf16, atol=1e-2, rtol=1e-2), (
        "max |diff| vs bf16 ref = %e" % float(jnp.max(jnp.abs(out - ref_bf16))))
    # Loose check against the pure f32 semantics of the PyTorch module.
    assert jnp.allclose(out, ref_f32, atol=5e-2, rtol=5e-2), (
        "max |diff| vs f32 ref = %e" % float(jnp.max(jnp.abs(out - ref_f32))))

    # Second shape exercising the multi-block grid (>= 2 steps, ragged batch).
    state2 = jax.random.normal(k_state2, (20, state_dim), jnp.float32)
    out2 = jax.block_until_ready(
        actor_forward(state2, prepped, action_dim=action_dim,
                      max_action=max_action))
    ref2 = actor_forward_ref_bf16(state2, params, max_action)
    assert out2.shape == (20, action_dim)
    assert jnp.allclose(out2, ref2, atol=1e-2, rtol=1e-2), (
        "max |diff| vs bf16 ref (B=20) = %e"
        % float(jnp.max(jnp.abs(out2 - ref2))))

    print("KERNEL_OK")
</pallas_src>

<mosaic_0001>
module attributes {stable_mosaic.version = 11 : i64} {
  func.func @actor_kernel(%arg0: i32, %arg1: memref<2x16xf32, #tpu.memory_space<vmem>>, %arg2: memref<16x128xbf16, #tpu.memory_space<vmem>>, %arg3: memref<1x128xf32, #tpu.memory_space<vmem>>, %arg4: memref<128x128xbf16, #tpu.memory_space<vmem>>, %arg5: memref<1x128xf32, #tpu.memory_space<vmem>>, %arg6: memref<128x128xbf16, #tpu.memory_space<vmem>>, %arg7: memref<1x128xf32, #tpu.memory_space<vmem>>, %arg8: memref<2x128xf32, #tpu.memory_space<vmem>>) attributes {dimension_semantics = [#tpu.dimension_semantics<parallel>], iteration_bounds = array<i64: 1>, scalar_prefetch = 0 : i64, scratch_operands = 0 : i64, tpu.core_type = #tpu.core_type<tc>, window_params = [{transform_indices = @transform_0, window_bounds = array<i64: 2, 16>}, {pipeline_mode = #tpu.pipeline_mode<synchronous>, transform_indices = @transform_1, window_bounds = array<i64: 16, 128>}, {pipeline_mode = #tpu.pipeline_mode<synchronous>, transform_indices = @transform_2, window_bounds = array<i64: 1, 128>}, {pipeline_mode = #tpu.pipeline_mode<synchronous>, transform_indices = @transform_3, window_bounds = array<i64: 128, 128>}, {pipeline_mode = #tpu.pipeline_mode<synchronous>, transform_indices = @transform_4, window_bounds = array<i64: 1, 128>}, {pipeline_mode = #tpu.pipeline_mode<synchronous>, transform_indices = @transform_5, window_bounds = array<i64: 128, 128>}, {pipeline_mode = #tpu.pipeline_mode<synchronous>, transform_indices = @transform_6, window_bounds = array<i64: 1, 128>}, {transform_indices = @transform_7, window_bounds = array<i64: 2, 128>}]} {
    %c0 = arith.constant 0 : index
    %c0_0 = arith.constant 0 : index
    %0 = vector.load %arg1[%c0, %c0_0] : memref<2x16xf32, #tpu.memory_space<vmem>>, vector<2x16xf32>
    %1 = arith.truncf %0 : vector<2x16xf32> to vector<2x16xbf16>
    %c0_1 = arith.constant 0 : index
    %c0_2 = arith.constant 0 : index
    %2 = vector.load %arg2[%c0_1, %c0_2] : memref<16x128xbf16, #tpu.memory_space<vmem>>, vector<16x128xbf16>
    %cst = arith.constant dense<0.000000e+00> : vector<2x128xf32>
    %3 = tpu.matmul %1, %2, %cst {dimension_numbers = #tpu.dot_dimension_numbers<[1], [0], [0], [1], [0, 0, 1, 1], [], []>} : vector<2x16xbf16>, vector<16x128xbf16>, vector<2x128xf32> -> vector<2x128xf32>
    %c0_3 = arith.constant 0 : index
    %c0_4 = arith.constant 0 : index
    %4 = vector.load %arg3[%c0_3, %c0_4] : memref<1x128xf32, #tpu.memory_space<vmem>>, vector<1x128xf32>
    %5 = vector.broadcast %4 : vector<1x128xf32> to vector<2x128xf32>
    %6 = arith.addf %3, %5 : vector<2x128xf32>
    %cst_5 = arith.constant 0.000000e+00 : f32
    %7 = vector.broadcast %cst_5 : f32 to vector<2x128xf32>
    %8 = arith.maximumf %6, %7 : vector<2x128xf32>
    %9 = arith.truncf %8 : vector<2x128xf32> to vector<2x128xbf16>
    %c0_6 = arith.constant 0 : index
    %c0_7 = arith.constant 0 : index
    %10 = vector.load %arg4[%c0_6, %c0_7] : memref<128x128xbf16, #tpu.memory_space<vmem>>, vector<128x128xbf16>
    %cst_8 = arith.constant dense<0.000000e+00> : vector<2x128xf32>
    %11 = tpu.matmul %9, %10, %cst_8 {dimension_numbers = #tpu.dot_dimension_numbers<[1], [0], [0], [1], [0, 0, 1, 1], [], []>} : vector<2x128xbf16>, vector<128x128xbf16>, vector<2x128xf32> -> vector<2x128xf32>
    %c0_9 = arith.constant 0 : index
    %c0_10 = arith.constant 0 : index
    %12 = vector.load %arg5[%c0_9, %c0_10] : memref<1x128xf32, #tpu.memory_space<vmem>>, vector<1x128xf32>
    %13 = vector.broadcast %12 : vector<1x128xf32> to vector<2x128xf32>
    %14 = arith.addf %11, %13 : vector<2x128xf32>
    %cst_11 = arith.constant 0.000000e+00 : f32
    %15 = vector.broadcast %cst_11 : f32 to vector<2x128xf32>
    %16 = arith.maximumf %14, %15 : vector<2x128xf32>
    %17 = arith.truncf %16 : vector<2x128xf32> to vector<2x128xbf16>
    %c0_12 = arith.constant 0 : index
    %c0_13 = arith.constant 0 : index
    %18 = vector.load %arg6[%c0_12, %c0_13] : memref<128x128xbf16, #tpu.memory_space<vmem>>, vector<128x128xbf16>
    %cst_14 = arith.constant dense<0.000000e+00> : vector<2x128xf32>
    %19 = tpu.matmul %17, %18, %cst_14 {dimension_numbers = #tpu.dot_dimension_numbers<[1], [0], [0], [1], [0, 0, 1, 1], [], []>} : vector<2x128xbf16>, vector<128x128xbf16>, vector<2x128xf32> -> vector<2x128xf32>
    %c0_15 = arith.constant 0 : index
    %c0_16 = arith.constant 0 : index
    %20 = vector.load %arg7[%c0_15, %c0_16] : memref<1x128xf32, #tpu.memory_space<vmem>>, vector<1x128xf32>
    %21 = vector.broadcast %20 : vector<1x128xf32> to vector<2x128xf32>
    %22 = arith.addf %19, %21 : vector<2x128xf32>
    %23 = math.tanh %22 : vector<2x128xf32>
    %cst_17 = arith.constant 2.000000e+00 : f32
    %24 = vector.broadcast %cst_17 : f32 to vector<2x128xf32>
    %25 = arith.mulf %24, %23 : vector<2x128xf32>
    %c0_18 = arith.constant 0 : index
    %c0_19 = arith.constant 0 : index
    %26 = vector.load %arg8[%c0_18, %c0_19] : memref<2x128xf32, #tpu.memory_space<vmem>>, vector<2x128xf32>
    tpu.vector_store %arg8[%c0_18, %c0_19], %25 {strides = array<i32>} : memref<2x128xf32, #tpu.memory_space<vmem>>, vector<2x128xf32>,
    return
  }
  func.func @transform_0(%arg0: i32) -> (i32, i32) {
    %c0_i32 = arith.constant 0 : i32
    %c0_i32_0 = arith.constant 0 : i32
    return %arg0, %c0_i32 : i32, i32
  }
  func.func @transform_1(%arg0: i32) -> (i32, i32) {
    %c0_i32 = arith.constant 0 : i32
    %c0_i32_0 = arith.constant 0 : i32
    %c0_i32_1 = arith.constant 0 : i32
    return %c0_i32, %c0_i32_0 : i32, i32
  }
  func.func @transform_2(%arg0: i32) -> (i32, i32) {
    %c0_i32 = arith.constant 0 : i32
    %c0_i32_0 = arith.constant 0 : i32
    %c0_i32_1 = arith.constant 0 : i32
    return %c0_i32, %c0_i32_0 : i32, i32
  }
  func.func @transform_3(%arg0: i32) -> (i32, i32) {
    %c0_i32 = arith.constant 0 : i32
    %c0_i32_0 = arith.constant 0 : i32
    %c0_i32_1 = arith.constant 0 : i32
    return %c0_i32, %c0_i32_0 : i32, i32
  }
  func.func @transform_4(%arg0: i32) -> (i32, i32) {
    %c0_i32 = arith.constant 0 : i32
    %c0_i32_0 = arith.constant 0 : i32
    %c0_i32_1 = arith.constant 0 : i32
    return %c0_i32, %c0_i32_0 : i32, i32
  }
  func.func @transform_5(%arg0: i32) -> (i32, i32) {
    %c0_i32 = arith.constant 0 : i32
    %c0_i32_0 = arith.constant 0 : i32
    %c0_i32_1 = arith.constant 0 : i32
    return %c0_i32, %c0_i32_0 : i32, i32
  }
  func.func @transform_6(%arg0: i32) -> (i32, i32) {
    %c0_i32 = arith.constant 0 : i32
    %c0_i32_0 = arith.constant 0 : i32
    %c0_i32_1 = arith.constant 0 : i32
    return %c0_i32, %c0_i32_0 : i32, i32
  }
  func.func @transform_7(%arg0: i32) -> (i32, i32) {
    %c0_i32 = arith.constant 0 : i32
    %c0_i32_0 = arith.constant 0 : i32
    return %arg0, %c0_i32 : i32, i32
  }
}

</mosaic_0001>

<llo_original>
// kernel: actor_forward.1
$region0: #{actor_forward.1}
  #allocation0 [shape = 'u32[]', space=smem, size = 0x4, offset = 0x4, fixed_abs, tag = 'smem constant byte address 0x4 - core index']
  #allocation1 [shape = 'u32[72,128]{1,0:T(1,128)}', space=vmem, size = 0x9000, scoped, tag = 'internal scratch']
  %s0 = inlined_call_operand.hbm [shape: f32[2,16], index: 0, kind: input, shape index: {}]
  %s1 = inlined_call_operand.hbm [shape: bf16[16,128], index: 1, kind: input, shape index: {}]
  %s2 = inlined_call_operand.hbm [shape: f32[1,128], index: 2, kind: input, shape index: {}]
  %s3 = inlined_call_operand.hbm [shape: bf16[128,128], index: 3, kind: input, shape index: {}]
  %s4 = inlined_call_operand.vmem [shape: f32[1,128], index: 4, kind: input, shape index: {}]
  %s5 = inlined_call_operand.hbm [shape: bf16[128,128], index: 5, kind: input, shape index: {}]
  %s6 = inlined_call_operand.vmem [shape: f32[1,128], index: 6, kind: input, shape index: {}]
  %s7 = inlined_call_operand.hbm [shape: f32[2,128], index: 7, kind: output, shape index: {}]
  %s8 = sld [smem:[#allocation0]]
  $region58: #{actor_forward.1} parent=0
    _
  %s10 = ssub.s32 1, %s8
  %s11 = scalar_select 0, %s10, %s8
  $region1: #{actor_forward.1} parent=0
    #allocation2 [shape = 'u8[1024]{0}', space=vmem, size = 0x400, scoped, tag = 'input window, operand 0, single buffered']
    #allocation3 [shape = 's32[1]{0}', space=sflag, size = 0x4, scoped, tag = 'scoped memory for actor_forward.1']
    #allocation4 [shape = 's32[1]{0}', space=sflag, size = 0x4, scoped, tag = 'scoped memory for actor_forward.1']
    #allocation5 [shape = 'u8[4096]{0}', space=vmem, size = 0x1000, scoped, tag = 'input window, operand 1, single buffered']
    #allocation6 [shape = 's32[1]{0}', space=sflag, size = 0x4, scoped, tag = 'scoped memory for actor_forward.1']
    #allocation7 [shape = 'u8[512]{0}', space=vmem, size = 0x400, scoped, tag = 'input window, operand 2, single buffered']
    #allocation8 [shape = 'u8[32768]{0}', space=vmem, size = 0x8000, scoped, tag = 'input window, operand 3, single buffered']
    #allocation9 [shape = 's32[1]{0}', space=sflag, size = 0x4, scoped, tag = 'scoped memory for actor_forward.1']
    #allocation10 [shape = 'u8[32768]{0}', space=vmem, size = 0x8000, scoped, tag = 'input window, operand 5, single buffered']
    #allocation11 [shape = 'u8[1024]{0}', space=vmem, size = 0x400, scoped, tag = 'output window, operand 0, single buffered']
    %12 = vsyncpa [#allocation3], 0
    %13 = vsyncpa [#allocation6], 0
    %14 = vsyncpa [#allocation9], 0
    %15 = vsyncpa [#allocation4], 0
    // Predicated region
    $region2: #{actor_forward.1} parent=1 // pred_check
      _
    $region3: #{actor_forward.1} parent=1 // pred_check_branch
      %17 = sbr.rel (0) target = $region5
    $region4: #{actor_forward.1} parent=1 // pred_region
      %19 = vsyncadd [#allocation3], 0
      %s21 = sshll.u32 %s0, 4
      %s22 = int_to_ptr.hbm [resolvable:$true] %s21
      %s23 = sshll.u32 [#allocation2], 4
      %s24 = int_to_ptr.vmem [resolvable:$true] %s23
      %26 = dma.hbm_to_vmem [thread:$0]  %s22, 32, %s24, [#allocation3]
    $region5: #{actor_forward.1} parent=1 // pred_fallthru
      _
    // Predicated region
    $region6: #{actor_forward.1} parent=1 // pred_check
      _
    $region7: #{actor_forward.1} parent=1 // pred_check_branch
      %28 = sbr.rel (0) target = $region9
    $region8: #{actor_forward.1} parent=1 // pred_region
      %30 = vsyncadd [#allocation6], 0
      %s31 = sshll.u32 %s1, 4
      %s32 = int_to_ptr.hbm [resolvable:$true] %s31
      %s33 = sshll.u32 [#allocation5], 4
      %s34 = int_to_ptr.vmem [resolvable:$true] %s33
      %39 = dma.hbm_to_vmem [thread:$0]  %s32, 128, %s34, [#allocation6], 64, 64, 4
    $region9: #{actor_forward.1} parent=1 // pred_fallthru
      _
    // Predicated region
    $region10: #{actor_forward.1} parent=1 // pred_check
      _
    $region11: #{actor_forward.1} parent=1 // pred_check_branch
      %41 = sbr.rel (0) target = $region13
    $region12: #{actor_forward.1} parent=1 // pred_region
      %43 = vsyncadd [#allocation6], 0
      %s45 = sshll.u32 %s2, 4
      %s46 = int_to_ptr.hbm [resolvable:$true] %s45
      %s47 = sshll.u32 [#allocation7], 4
      %s48 = int_to_ptr.vmem [resolvable:$true] %s47
      %50 = dma.hbm_to_vmem [thread:$0]  %s46, 16, %s48, [#allocation6]
    $region13: #{actor_forward.1} parent=1 // pred_fallthru
      _
    // Predicated region
    $region14: #{actor_forward.1} parent=1 // pred_check
      _
    $region15: #{actor_forward.1} parent=1 // pred_check_branch
      %52 = sbr.rel (0) target = $region17
    $region16: #{actor_forward.1} parent=1 // pred_region
      %54 = vsyncadd [#allocation9], 0
      %s55 = sshll.u32 %s3, 4
      %s56 = int_to_ptr.hbm [resolvable:$true] %s55
      %s57 = sshll.u32 [#allocation8], 4
      %s58 = int_to_ptr.vmem [resolvable:$true] %s57
      %63 = dma.hbm_to_vmem [thread:$0]  %s56, 1024, %s58, [#allocation9], 64, 64, 4
    $region17: #{actor_forward.1} parent=1 // pred_fallthru
      _
    // Predicated region
    $region18: #{actor_forward.1} parent=1 // pred_check
      _
    $region19: #{actor_forward.1} parent=1 // pred_check_branch
      %65 = sbr.rel (0) target = $region21
    $region20: #{actor_forward.1} parent=1 // pred_region
      _
    $region21: #{actor_forward.1} parent=1 // pred_fallthru
      _
    // Predicated region
    $region22: #{actor_forward.1} parent=1 // pred_check
      _
    $region23: #{actor_forward.1} parent=1 // pred_check_branch
      %67 = sbr.rel (0) target = $region25
    $region24: #{actor_forward.1} parent=1 // pred_region
      %69 = vsyncadd [#allocation9], 0
      %s70 = sshll.u32 %s5, 4
      %s71 = int_to_ptr.hbm [resolvable:$true] %s70
      %s72 = sshll.u32 [#allocation10], 4
      %s73 = int_to_ptr.vmem [resolvable:$true] %s72
      %78 = dma.hbm_to_vmem [thread:$0]  %s71, 1024, %s73, [#allocation9], 64, 64, 4
    $region25: #{actor_forward.1} parent=1 // pred_fallthru
      _
    // Predicated region
    $region26: #{actor_forward.1} parent=1 // pred_check
      _
    $region27: #{actor_forward.1} parent=1 // pred_check_branch
      %80 = sbr.rel (0) target = $region29
    $region28: #{actor_forward.1} parent=1 // pred_region
      _
    $region29: #{actor_forward.1} parent=1 // pred_fallthru
      _
    // Predicated region
    $region30: #{actor_forward.1} parent=1 // pred_check
      _
    $region31: #{actor_forward.1} parent=1 // pred_check_branch
      %82 = sbr.rel (0) target = $region33
    $region32: #{actor_forward.1} parent=1 // pred_region
      %84 = dma.done [#allocation3], 32
    $region33: #{actor_forward.1} parent=1 // pred_fallthru
      _
    // Predicated region
    $region34: #{actor_forward.1} parent=1 // pred_check
      _
    $region35: #{actor_forward.1} parent=1 // pred_check_branch
      %86 = sbr.rel (0) target = $region37
    $region36: #{actor_forward.1} parent=1 // pred_region
      %88 = dma.done [#allocation6], 128
    $region37: #{actor_forward.1} parent=1 // pred_fallthru
      _
    // Predicated region
    $region38: #{actor_forward.1} parent=1 // pred_check
      _
    $region39: #{actor_forward.1} parent=1 // pred_check_branch
      %90 = sbr.rel (0) target = $region41
    $region40: #{actor_forward.1} parent=1 // pred_region
      %92 = dma.done [#allocation6], 16
    $region41: #{actor_forward.1} parent=1 // pred_fallthru
      _
    // Predicated region
    $region42: #{actor_forward.1} parent=1 // pred_check
      _
    $region43: #{actor_forward.1} parent=1 // pred_check_branch
      %94 = sbr.rel (0) target = $region45
    $region44: #{actor_forward.1} parent=1 // pred_region
      %96 = dma.done [#allocation9], 1024
    $region45: #{actor_forward.1} parent=1 // pred_fallthru
      _
    // Predicated region
    $region46: #{actor_forward.1} parent=1 // pred_check
      _
    $region47: #{actor_forward.1} parent=1 // pred_check_branch
      %98 = sbr.rel (0) target = $region49
    $region48: #{actor_forward.1} parent=1 // pred_region
      %100 = dma.done [#allocation9], 1024
    $region49: #{actor_forward.1} parent=1 // pred_fallthru
      _
    %v102 = vld [vmem:[#allocation2] sm:$0x3]
    %v103 = vpack.c.bf16 %v102, %v102
    %v104 = vld [vmem:[#allocation5] sm:$0xf]
    %v105 = vld [vmem:[#allocation5 + $0x4] sm:$0xf]
    %v106 = vld [vmem:[#allocation7] sm:$0x1]
    %v108 = vperm.slane %v106, 0
    %v112 = vunpack.c.l.b16 %v104
    %v113 = vunpack.c.l.b16 %v105
    %v114 = vpack.c.b16 %v113, %v112
    %vm116 = vcmask 130048
    %v118 = vsel %vm116, %v103, 0
    %120 = vmatpush.bf16.msra.mxu0 0
    %121 = vmatpush.bf16.msra.mxu0 0
    %122 = vmatpush.bf16.msra.mxu0 0
    %123 = vmatpush.bf16.msra.mxu0 0
    %124 = vmatpush.bf16.msra.mxu0 0
    %125 = vmatpush.bf16.msra.mxu0 0
    %126 = vmatpush.bf16.msra.mxu0 0
    %127 = vmatpush.bf16.msra.mxu0 %v114
    %128 = vmatmul.bf16.gmra.mxu0 %v118
    %v129 = vpop.f32.mrf.mxu0
    %v130 = vadd.f32 %v108, %v129
    %v131 = vpop.f32.mrf.mxu0
    %132 = vdwg.mxu0
    %v133 = vmax.f32 %v130, 0.0
    %v134 = vpack.c.bf16 %v133, %v133
    %v135 = vld [vmem:[#allocation8] sm:$0xf]
    %v136 = vld [vmem:[#allocation8 + $0x4] sm:$0xf]
    %v137 = vld [vmem:[#allocation8 + $0x8] sm:$0xf]
    %v138 = vld [vmem:[#allocation8 + $0xc] sm:$0xf]
    %v139 = vld [vmem:[#allocation8 + $0x10] sm:$0xf]
    %v140 = vld [vmem:[#allocation8 + $0x14] sm:$0xf]
    %v141 = vld [vmem:[#allocation8 + $0x18] sm:$0xf]
    %v142 = vld [vmem:[#allocation8 + $0x1c] sm:$0xf]
    %v143 = vld [vmem:[#allocation8 + $0x20] sm:$0xf]
    %v144 = vld [vmem:[#allocation8 + $0x24] sm:$0xf]
    %v145 = vld [vmem:[#allocation8 + $0x28] sm:$0xf]
    %v146 = vld [vmem:[#allocation8 + $0x2c] sm:$0xf]
    %v147 = vld [vmem:[#allocation8 + $0x30] sm:$0xf]
    %v148 = vld [vmem:[#allocation8 + $0x34] sm:$0xf]
    %v149 = vld [vmem:[#allocation8 + $0x38] sm:$0xf]
    %v150 = vld [vmem:[#allocation8 + $0x3c] sm:$0xf]
    %v151 = vld [vmem:[%s4] sm:$0x1]
    %v153 = vperm.slane %v151, 0
    %v171 = vunpack.c.l.b16 %v135
    %v172 = vunpack.c.l.b16 %v136
    %v173 = vunpack.c.l.b16 %v137
    %v174 = vunpack.c.l.b16 %v138
    %v175 = vunpack.c.l.b16 %v139
    %v176 = vunpack.c.l.b16 %v140
    %v177 = vunpack.c.l.b16 %v141
    %v178 = vunpack.c.l.b16 %v142
    %v179 = vunpack.c.l.b16 %v143
    %v180 = vunpack.c.l.b16 %v144
    %v181 = vunpack.c.l.b16 %v145
    %v182 = vunpack.c.l.b16 %v146
    %v183 = vunpack.c.l.b16 %v147
    %v184 = vunpack.c.l.b16 %v148
    %v185 = vunpack.c.l.b16 %v149
    %v186 = vunpack.c.l.b16 %v150
    %v187 = vpack.c.b16 %v172, %v171
    %v188 = vpack.c.b16 %v174, %v173
    %v189 = vpack.c.b16 %v176, %v175
    %v190 = vpack.c.b16 %v178, %v177
    %v191 = vpack.c.b16 %v180, %v179
    %v192 = vpack.c.b16 %v182, %v181
    %v193 = vpack.c.b16 %v184, %v183
    %v194 = vpack.c.b16 %v186, %v185
    %203 = vmatpush.bf16.msra.mxu0 %v194
    %204 = vmatpush.bf16.msra.mxu0 %v193
    %205 = vmatpush.bf16.msra.mxu0 %v192
    %206 = vmatpush.bf16.msra.mxu0 %v191
    %207 = vmatpush.bf16.msra.mxu0 %v190
    %208 = vmatpush.bf16.msra.mxu0 %v189
    %209 = vmatpush.bf16.msra.mxu0 %v188
    %210 = vmatpush.bf16.msra.mxu0 %v187
    %211 = vmatmul.bf16.gmra.mxu0 %v134
    %v212 = vpop.f32.mrf.mxu0
    %v213 = vadd.f32 %v153, %v212
    %v214 = vpop.f32.mrf.mxu0
    %215 = vdwg.mxu0
    %v216 = vmax.f32 %v213, 0.0
    %v217 = vpack.c.bf16 %v216, %v216
    %v218 = vld [vmem:[#allocation10] sm:$0xf]
    %v219 = vld [vmem:[#allocation10 + $0x4] sm:$0xf]
    %v220 = vld [vmem:[#allocation10 + $0x8] sm:$0xf]
    %v221 = vld [vmem:[#allocation10 + $0xc] sm:$0xf]
    %v222 = vld [vmem:[#allocation10 + $0x10] sm:$0xf]
    %v223 = vld [vmem:[#allocation10 + $0x14] sm:$0xf]
    %v224 = vld [vmem:[#allocation10 + $0x18] sm:$0xf]
    %v225 = vld [vmem:[#allocation10 + $0x1c] sm:$0xf]
    %v226 = vld [vmem:[#allocation10 + $0x20] sm:$0xf]
    %v227 = vld [vmem:[#allocation10 + $0x24] sm:$0xf]
    %v228 = vld [vmem:[#allocation10 + $0x28] sm:$0xf]
    %v229 = vld [vmem:[#allocation10 + $0x2c] sm:$0xf]
    %v230 = vld [vmem:[#allocation10 + $0x30] sm:$0xf]
    %v231 = vld [vmem:[#allocation10 + $0x34] sm:$0xf]
    %v232 = vld [vmem:[#allocation10 + $0x38] sm:$0xf]
    %v233 = vld [vmem:[#allocation10 + $0x3c] sm:$0xf]
    %v234 = vld [vmem:[%s6] sm:$0x1]
    %v236 = vperm.slane %v234, 0
    %v254 = vunpack.c.l.b16 %v218
    %v255 = vunpack.c.l.b16 %v219
    %v256 = vunpack.c.l.b16 %v220
    %v257 = vunpack.c.l.b16 %v221
    %v258 = vunpack.c.l.b16 %v222
    %v259 = vunpack.c.l.b16 %v223
    %v260 = vunpack.c.l.b16 %v224
    %v261 = vunpack.c.l.b16 %v225
    %v262 = vunpack.c.l.b16 %v226
    %v263 = vunpack.c.l.b16 %v227
    %v264 = vunpack.c.l.b16 %v228
    %v265 = vunpack.c.l.b16 %v229
    %v266 = vunpack.c.l.b16 %v230
    %v267 = vunpack.c.l.b16 %v231
    %v268 = vunpack.c.l.b16 %v232
    %v269 = vunpack.c.l.b16 %v233
    %v270 = vpack.c.b16 %v255, %v254
    %v271 = vpack.c.b16 %v257, %v256
    %v272 = vpack.c.b16 %v259, %v258
    %v273 = vpack.c.b16 %v261, %v260
    %v274 = vpack.c.b16 %v263, %v262
    %v275 = vpack.c.b16 %v265, %v264
    %v276 = vpack.c.b16 %v267, %v266
    %v277 = vpack.c.b16 %v269, %v268
    %286 = vmatpush.bf16.msra.mxu0 %v277
    %287 = vmatpush.bf16.msra.mxu0 %v276
    %288 = vmatpush.bf16.msra.mxu0 %v275
    %289 = vmatpush.bf16.msra.mxu0 %v274
    %290 = vmatpush.bf16.msra.mxu0 %v273
    %291 = vmatpush.bf16.msra.mxu0 %v272
    %292 = vmatpush.bf16.msra.mxu0 %v271
    %293 = vmatpush.bf16.msra.mxu0 %v270
    %294 = vmatmul.bf16.gmra.mxu0 %v217
    %v295 = vpop.f32.mrf.mxu0
    %v296 = vadd.f32 %v236, %v295
    %v297 = vpop.f32.mrf.mxu0
    %298 = vdwg.mxu0
    %v299 = vtanh.pop %v296
    %v300 = vmul.f32 %v299, 2.0
    %301 = vst [vmem:[#allocation11] sm:$0x3] %v300
    // Predicated region
    $region50: #{actor_forward.1} parent=1 // pred_check
      _
    $region51: #{actor_forward.1} parent=1 // pred_check_branch
      %303 = sbr.rel (0) target = $region53
    $region52: #{actor_forward.1} parent=1 // pred_region
      %305 = vsyncadd [#allocation4], 0
      %s307 = sshll.u32 [#allocation11], 4
      %s308 = int_to_ptr.vmem [resolvable:$true] %s307
      %s309 = sshll.u32 %s7, 4
      %s310 = int_to_ptr.hbm [resolvable:$true] %s309
      %312 = dma.vmem_to_hbm [thread:$0]  %s308, 32, %s310, [#allocation4]
    $region53: #{actor_forward.1} parent=1 // pred_fallthru
      _
    // Predicated region
    $region54: #{actor_forward.1} parent=1 // pred_check
      _
    $region55: #{actor_forward.1} parent=1 // pred_check_branch
      %314 = sbr.rel (0) target = $region57
    $region56: #{actor_forward.1} parent=1 // pred_region
      %316 = dma.done [#allocation4], 32
    $region57: #{actor_forward.1} parent=1 // pred_fallthru
      _
    %317 = vsyncpa [#allocation3], 1
    %318 = vsyncpa [#allocation6], 1
    %319 = vsyncpa [#allocation9], 1
    %320 = vsyncpa [#allocation4], 1

</llo_original>
